<compile_context>
chip_gen: v7x
topology: tpu7x:2x2x1
jax: 0.10.0
libtpu: 0.0.40
codegen_flags: <defaults>
</compile_context>

<pallas_src>
import jax
import jax.numpy as jnp
from jax import lax
from jax.experimental import pallas as pl
from jax.experimental.pallas import tpu as pltpu

_LANES = 128               # lane width of the dense face
_CHUNK_ROWS = 256          # rows folded per inner step (multiple of 8/16/32)
_MIN_PALLAS_BYTES = 512 * 1024


def _dice_partial_kernel(p_ref, t_ref, pt_ref, un_ref, acc_pt, acc_un):
    """Grid = (C, RS, N, KH). p/t blocks: (1, 1, TR, 128); outputs (1,1,1,1)."""
    n = pl.program_id(2)
    k = pl.program_id(3)

    # First reduction step of this (channel, row-split): zero the vreg-group
    # accumulators (scratch persists across grid iterations).
    @pl.when(jnp.logical_and(n == 0, k == 0))
    def _init():
        acc_pt[...] = jnp.zeros_like(acc_pt)
        acc_un[...] = jnp.zeros_like(acc_un)

    tr = p_ref.shape[2]
    n_chunks = tr // _CHUNK_ROWS
    tail = tr - n_chunks * _CHUNK_ROWS

    def fold(start, rows, a_pt, a_un):
        # Per-chunk load from the VMEM tile (native dtype, cast per chunk),
        # products folded into one (8, 128) vreg-group with pure VALU adds.
        # The reshape stays inside (8, 128) tile boundaries, so it is free.
        p = p_ref[0, 0, pl.ds(start, rows), :].astype(jnp.float32)
        t = t_ref[0, 0, pl.ds(start, rows), :].astype(jnp.float32)
        a_pt = a_pt + (p * t).reshape(rows // 8, 8, _LANES).sum(axis=0)
        a_un = a_un + (p * p + t * t).reshape(rows // 8, 8, _LANES).sum(axis=0)
        return a_pt, a_un

    a_pt = acc_pt[...]
    a_un = acc_un[...]
    if n_chunks > 0:
        def body(g, carry):
            start = pl.multiple_of(g * _CHUNK_ROWS, _CHUNK_ROWS)
            return fold(start, _CHUNK_ROWS, carry[0], carry[1])
        a_pt, a_un = lax.fori_loop(0, n_chunks, body, (a_pt, a_un))
    if tail > 0:
        a_pt, a_un = fold(n_chunks * _CHUNK_ROWS, tail, a_pt, a_un)
    acc_pt[...] = a_pt
    acc_un[...] = a_un

    # Last reduction step: one XLU cross-lane/sublane reduce and one tiny
    # store per (channel, row-split). smooth / division happen in JAX glue.
    @pl.when(jnp.logical_and(n == pl.num_programs(2) - 1,
                             k == pl.num_programs(3) - 1))
    def _finalize():
        pt_ref[...] = jnp.reshape(jnp.sum(acc_pt[...]), (1, 1, 1, 1))
        un_ref[...] = jnp.reshape(jnp.sum(acc_un[...]), (1, 1, 1, 1))


def _target_tile_bytes():
    """Generation-aware per-input tile budget (per buffer)."""
    try:
        info = pltpu.get_tpu_info()
        vmem = getattr(info, "vmem_capacity_bytes", 0) or 0
        if vmem >= 100 * (1 << 20):        # v5e / v6e: 128 MiB of VMEM
            return 4 << 20
    except Exception:
        pass
    return 2 << 20                         # conservative default (v7x: 64 MiB)


def _plan_tiling(r0, itemsize, target_bytes):
    """Pick (TR, RS, KH, R): row tile, row split, inner blocks, padded rows."""
    gran = {4: 8, 2: 16, 1: 32}.get(itemsize, 8)   # sublane packing granule
    tr_target = max(gran, (target_bytes // (_LANES * itemsize)) // gran * gran)
    nb = max(1, -(-r0 // tr_target))       # row blocks at the target tile size
    rs = 2 if r0 >= 2 * gran else 1        # second parallel axis for megacore
    kh = -(-nb // rs)
    nb = rs * kh
    rows_per_block = -(-r0 // nb)          # re-derive TR so padding stays tiny
    tr = -(-rows_per_block // gran) * gran
    return tr, rs, kh, nb * tr


def _dice_sums_pallas(pred, target):
    """Per-channel (sum p*t, sum p*p + t*t), each shape (C,), via Pallas."""
    N, C, H, W = pred.shape
    HW = H * W
    itemsize = max(jnp.dtype(pred.dtype).itemsize,
                   jnp.dtype(target.dtype).itemsize)

    r0 = -(-HW // _LANES)
    TR, RS, KH, R = _plan_tiling(r0, itemsize, _target_tile_bytes())
    hw_pad = R * _LANES

    # Lane-dense face: zero-pad flattened HW (zeros contribute nothing to
    # p*t / p*p / t*t) so every DMA block is a full unmasked (TR, 128) tile.
    p2 = pred.reshape(N, C, HW)
    t2 = target.reshape(N, C, HW)
    if hw_pad != HW:
        pad = ((0, 0), (0, 0), (0, hw_pad - HW))
        p2 = jnp.pad(p2, pad)
        t2 = jnp.pad(t2, pad)
    p4 = p2.reshape(N, C, R, _LANES)
    t4 = t2.reshape(N, C, R, _LANES)

    tile_bytes = TR * _LANES * itemsize
    # 2 inputs x 2 buffers x tile + chunk temps / accumulators headroom.
    vmem_limit = int(min(max(4 * tile_bytes + (8 << 20), 16 << 20), 48 << 20))

    pt_part, un_part = pl.pallas_call(
        _dice_partial_kernel,
        out_shape=(
            jax.ShapeDtypeStruct((C, RS, 1, 1), jnp.float32),
            jax.ShapeDtypeStruct((C, RS, 1, 1), jnp.float32),
        ),
        grid_spec=pltpu.PrefetchScalarGridSpec(
            num_scalar_prefetch=0,
            grid=(C, RS, N, KH),
            in_specs=[
                pl.BlockSpec((1, 1, TR, _LANES),
                             lambda c, rs, n, k: (n, c, rs * KH + k, 0)),
                pl.BlockSpec((1, 1, TR, _LANES),
                             lambda c, rs, n, k: (n, c, rs * KH + k, 0)),
            ],
            out_specs=[
                pl.BlockSpec((1, 1, 1, 1), lambda c, rs, n, k: (c, rs, 0, 0)),
                pl.BlockSpec((1, 1, 1, 1), lambda c, rs, n, k: (c, rs, 0, 0)),
            ],
            scratch_shapes=[
                pltpu.VMEM((8, _LANES), jnp.float32),   # running sum of p*t
                pltpu.VMEM((8, _LANES), jnp.float32),   # running sum of p*p+t*t
            ],
        ),
        compiler_params=pltpu.CompilerParams(
            dimension_semantics=("parallel", "parallel", "arbitrary",
                                 "arbitrary"),
            vmem_limit_bytes=vmem_limit,
        ),
    )(p4, t4)

    pt = pt_part.reshape(C, RS).sum(axis=1)
    un = un_part.reshape(C, RS).sum(axis=1)
    return pt, un


def dice_loss(pred, target, n_channels, smooth=1e-5, weight=None,
              softmax=False, use_pallas=None):
    """Forward pass of diceLoss. pred/target: (N, C, H, W)."""
    assert pred.shape == target.shape and pred.ndim == 4
    N, C, H, W = pred.shape
    assert C == n_channels

    if softmax:
        # Matches the reference module: softmax over the channel dim of BOTH
        # pred and target (plain-JAX glue).
        pred = jax.nn.softmax(pred, axis=1)
        target = jax.nn.softmax(target, axis=1)

    if weight is None:
        weight = [1.0] * n_channels
    weight = jnp.asarray(weight, jnp.float32)

    if use_pallas is None:
        nbytes = pred.size * jnp.dtype(pred.dtype).itemsize
        use_pallas = nbytes >= _MIN_PALLAS_BYTES

    if use_pallas:
        pt, un = _dice_sums_pallas(pred, target)
    else:
        p = pred.astype(jnp.float32)
        t = target.astype(jnp.float32)
        pt = jnp.sum(p * t, axis=(0, 2, 3))
        un = jnp.sum(p * p, axis=(0, 2, 3)) + jnp.sum(t * t, axis=(0, 2, 3))

    intersection = 2.0 * pt + smooth
    union = un + smooth
    per_ch = 1.0 - intersection / union
    # Trivial weighted average over channels (tiny, stays in JAX glue).
    return jnp.sum(per_ch * weight) / n_channels


def _dice_loss_ref(pred, target, n_channels, smooth=1e-5, weight=None,
                   softmax=False):
    """Pure-JAX reference mirroring the PyTorch module."""
    if softmax:
        pred = jax.nn.softmax(pred, axis=1)
        target = jax.nn.softmax(target, axis=1)
    if weight is None:
        weight = [1.0] * n_channels
    loss = 0.0
    for i in range(n_channels):
        p = pred[:, i]
        t = target[:, i]
        inter = 2.0 * jnp.sum(p * t) + smooth
        union = jnp.sum(p * p) + jnp.sum(t * t) + smooth
        loss += (1.0 - inter / union) * weight[i]
    return loss / n_channels


if __name__ == "__main__":
    key = jax.random.PRNGKey(0)
    k1, k2, k3, k4 = jax.random.split(key, 4)

    # Primary check: N=2, C=4, 16x16 spatial (forces the Pallas path).
    N, C, H, W = 2, 4, 16, 16
    pred = jax.random.uniform(k1, (N, C, H, W), dtype=jnp.float32)
    target = (jax.random.uniform(k2, (N, C, H, W)) > 0.5).astype(jnp.float32)
    out = dice_loss(pred, target, n_channels=C, smooth=1e-5, use_pallas=True)
    out = jax.block_until_ready(out)
    ref = _dice_loss_ref(pred, target, n_channels=C, smooth=1e-5)
    assert jnp.allclose(out, ref, rtol=1e-5, atol=1e-6), (out, ref)

    # Second check: odd C, HW not a multiple of 128, weights + softmax path.
    N2, C2, H2, W2 = 2, 3, 24, 40
    pred2 = jax.random.normal(k3, (N2, C2, H2, W2), dtype=jnp.float32)
    target2 = jax.random.normal(k4, (N2, C2, H2, W2), dtype=jnp.float32)
    w = [0.5, 1.0, 2.0]
    out2 = dice_loss(pred2, target2, n_channels=C2, smooth=1e-5, weight=w,
                     softmax=True, use_pallas=True)
    out2 = jax.block_until_ready(out2)
    ref2 = _dice_loss_ref(pred2, target2, n_channels=C2, smooth=1e-5,
                          weight=w, softmax=True)
    assert jnp.allclose(out2, ref2, rtol=1e-5, atol=1e-6), (out2, ref2)

    print("KERNEL_OK")
</pallas_src>

<mosaic_0001>
module attributes {stable_mosaic.version = 11 : i64} {
  func.func @_dice_partial_kernel(%arg0: i32, %arg1: i32, %arg2: i32, %arg3: i32, %arg4: memref<1x1x8x128xf32, #tpu.memory_space<vmem>>, %arg5: memref<1x1x8x128xf32, #tpu.memory_space<vmem>>, %arg6: memref<1x1x1x1xf32, #tpu.memory_space<vmem>>, %arg7: memref<1x1x1x1xf32, #tpu.memory_space<vmem>>, %arg8: memref<8x128xf32, #tpu.memory_space<vmem>>, %arg9: memref<8x128xf32, #tpu.memory_space<vmem>>) attributes {dimension_semantics = [#tpu.dimension_semantics<parallel>, #tpu.dimension_semantics<parallel>, #tpu.dimension_semantics<arbitrary>, #tpu.dimension_semantics<arbitrary>], iteration_bounds = array<i64: 4, 1, 2, 1>, scalar_prefetch = 0 : i64, scratch_operands = 2 : i64, tpu.core_type = #tpu.core_type<tc>, window_params = [{transform_indices = @transform_0, window_bounds = array<i64: 1, 1, 8, 128>}, {transform_indices = @transform_1, window_bounds = array<i64: 1, 1, 8, 128>}, {transform_indices = @transform_2, window_bounds = array<i64: 1, 1, 1, 1>}, {transform_indices = @transform_3, window_bounds = array<i64: 1, 1, 1, 1>}]} {
    %c0_i32 = arith.constant 0 : i32
    %0 = arith.cmpi eq, %arg2, %c0_i32 : i32
    %c0_i32_0 = arith.constant 0 : i32
    %1 = arith.cmpi eq, %arg3, %c0_i32_0 : i32
    %2 = arith.andi %0, %1 : i1
    %3 = arith.extui %2 : i1 to i32
    %c0_i32_1 = arith.constant 0 : i32
    %4 = arith.cmpi ne, %3, %c0_i32_1 : i32
    scf.if %4 {
      %cst_20 = arith.constant 0.000000e+00 : f32
      %28 = vector.broadcast %cst_20 : f32 to vector<8x128xf32>
      %c0_21 = arith.constant 0 : index
      %c0_22 = arith.constant 0 : index
      %29 = vector.load %arg8[%c0_21, %c0_22] : memref<8x128xf32, #tpu.memory_space<vmem>>, vector<8x128xf32>
      tpu.vector_store %arg8[%c0_21, %c0_22], %28 {strides = array<i32>} : memref<8x128xf32, #tpu.memory_space<vmem>>, vector<8x128xf32>,
      %cst_23 = arith.constant 0.000000e+00 : f32
      %30 = vector.broadcast %cst_23 : f32 to vector<8x128xf32>
      %c0_24 = arith.constant 0 : index
      %c0_25 = arith.constant 0 : index
      %31 = vector.load %arg9[%c0_24, %c0_25] : memref<8x128xf32, #tpu.memory_space<vmem>>, vector<8x128xf32>
      tpu.vector_store %arg9[%c0_24, %c0_25], %30 {strides = array<i32>} : memref<8x128xf32, #tpu.memory_space<vmem>>, vector<8x128xf32>,
    } else {
    }
    %c0 = arith.constant 0 : index
    %c0_2 = arith.constant 0 : index
    %5 = vector.load %arg8[%c0, %c0_2] : memref<8x128xf32, #tpu.memory_space<vmem>>, vector<8x128xf32>
    %c0_3 = arith.constant 0 : index
    %c0_4 = arith.constant 0 : index
    %6 = vector.load %arg9[%c0_3, %c0_4] : memref<8x128xf32, #tpu.memory_space<vmem>>, vector<8x128xf32>
    %c0_5 = arith.constant 0 : index
    %c0_6 = arith.constant 0 : index
    %c0_7 = arith.constant 0 : index
    %c0_8 = arith.constant 0 : index
    %7 = vector.load %arg4[%c0_5, %c0_6, %c0_7, %c0_8] : memref<1x1x8x128xf32, #tpu.memory_space<vmem>>, vector<1x1x8x128xf32>
    %8 = vector.shape_cast %7 : vector<1x1x8x128xf32> to vector<8x128xf32>
    %c0_9 = arith.constant 0 : index
    %c0_10 = arith.constant 0 : index
    %c0_11 = arith.constant 0 : index
    %c0_12 = arith.constant 0 : index
    %9 = vector.load %arg5[%c0_9, %c0_10, %c0_11, %c0_12] : memref<1x1x8x128xf32, #tpu.memory_space<vmem>>, vector<1x1x8x128xf32>
    %10 = vector.shape_cast %9 : vector<1x1x8x128xf32> to vector<8x128xf32>
    %11 = arith.mulf %8, %10 : vector<8x128xf32>
    %12 = vector.shape_cast %11 : vector<8x128xf32> to vector<1x8x128xf32>
    %cst = arith.constant dense<0.000000e+00> : vector<8x128xf32>
    %13 = vector.multi_reduction <add>, %12, %cst [0] : vector<1x8x128xf32> to vector<8x128xf32>
    %14 = arith.addf %5, %13 : vector<8x128xf32>
    %15 = arith.mulf %8, %8 : vector<8x128xf32>
    %16 = arith.mulf %10, %10 : vector<8x128xf32>
    %17 = arith.addf %15, %16 : vector<8x128xf32>
    %18 = vector.shape_cast %17 : vector<8x128xf32> to vector<1x8x128xf32>
    %cst_13 = arith.constant dense<0.000000e+00> : vector<8x128xf32>
    %19 = vector.multi_reduction <add>, %18, %cst_13 [0] : vector<1x8x128xf32> to vector<8x128xf32>
    %20 = arith.addf %6, %19 : vector<8x128xf32>
    %c0_14 = arith.constant 0 : index
    %c0_15 = arith.constant 0 : index
    %21 = vector.load %arg8[%c0_14, %c0_15] : memref<8x128xf32, #tpu.memory_space<vmem>>, vector<8x128xf32>
    tpu.vector_store %arg8[%c0_14, %c0_15], %14 {strides = array<i32>} : memref<8x128xf32, #tpu.memory_space<vmem>>, vector<8x128xf32>,
    %c0_16 = arith.constant 0 : index
    %c0_17 = arith.constant 0 : index
    %22 = vector.load %arg9[%c0_16, %c0_17] : memref<8x128xf32, #tpu.memory_space<vmem>>, vector<8x128xf32>
    tpu.vector_store %arg9[%c0_16, %c0_17], %20 {strides = array<i32>} : memref<8x128xf32, #tpu.memory_space<vmem>>, vector<8x128xf32>,
    %c1_i32 = arith.constant 1 : i32
    %23 = arith.cmpi eq, %arg2, %c1_i32 : i32
    %c0_i32_18 = arith.constant 0 : i32
    %24 = arith.cmpi eq, %arg3, %c0_i32_18 : i32
    %25 = arith.andi %23, %24 : i1
    %26 = arith.extui %25 : i1 to i32
    %c0_i32_19 = arith.constant 0 : i32
    %27 = arith.cmpi ne, %26, %c0_i32_19 : i32
    scf.if %27 {
      %c0_20 = arith.constant 0 : index
      %c0_21 = arith.constant 0 : index
      %28 = vector.load %arg8[%c0_20, %c0_21] : memref<8x128xf32, #tpu.memory_space<vmem>>, vector<8x128xf32>
      %29 = vector.shape_cast %28 : vector<8x128xf32> to vector<1x8x128xf32>
      %cst_22 = arith.constant dense<0.000000e+00> : vector<1xf32>
      %30 = vector.multi_reduction <add>, %29, %cst_22 [1, 2] : vector<1x8x128xf32> to vector<1xf32>
      %31 = vector.shape_cast %30 : vector<1xf32> to vector<1x1x1xf32>
      %32 = vector.extract %31[0, 0, 0] : f32 from vector<1x1x1xf32>
      %33 = vector.broadcast %32 : f32 to vector<1x1x1x1xf32>
      %c0_23 = arith.constant 0 : index
      %c0_24 = arith.constant 0 : index
      %c0_25 = arith.constant 0 : index
      %c0_26 = arith.constant 0 : index
      %34 = vector.load %arg6[%c0_23, %c0_24, %c0_25, %c0_26] : memref<1x1x1x1xf32, #tpu.memory_space<vmem>>, vector<1x1x1x1xf32>
      tpu.vector_store %arg6[%c0_23, %c0_24, %c0_25, %c0_26], %33 {strides = array<i32>} : memref<1x1x1x1xf32, #tpu.memory_space<vmem>>, vector<1x1x1x1xf32>,
      %c0_27 = arith.constant 0 : index
      %c0_28 = arith.constant 0 : index
      %35 = vector.load %arg9[%c0_27, %c0_28] : memref<8x128xf32, #tpu.memory_space<vmem>>, vector<8x128xf32>
      %36 = vector.shape_cast %35 : vector<8x128xf32> to vector<1x8x128xf32>
      %cst_29 = arith.constant dense<0.000000e+00> : vector<1xf32>
      %37 = vector.multi_reduction <add>, %36, %cst_29 [1, 2] : vector<1x8x128xf32> to vector<1xf32>
      %38 = vector.shape_cast %37 : vector<1xf32> to vector<1x1x1xf32>
      %39 = vector.extract %38[0, 0, 0] : f32 from vector<1x1x1xf32>
      %40 = vector.broadcast %39 : f32 to vector<1x1x1x1xf32>
      %c0_30 = arith.constant 0 : index
      %c0_31 = arith.constant 0 : index
      %c0_32 = arith.constant 0 : index
      %c0_33 = arith.constant 0 : index
      %41 = vector.load %arg7[%c0_30, %c0_31, %c0_32, %c0_33] : memref<1x1x1x1xf32, #tpu.memory_space<vmem>>, vector<1x1x1x1xf32>
      tpu.vector_store %arg7[%c0_30, %c0_31, %c0_32, %c0_33], %40 {strides = array<i32>} : memref<1x1x1x1xf32, #tpu.memory_space<vmem>>, vector<1x1x1x1xf32>,
    } else {
    }
    return
  }
  func.func @transform_0(%arg0: i32, %arg1: i32, %arg2: i32, %arg3: i32) -> (i32, i32, i32, i32) {
    %c1_i32 = arith.constant 1 : i32
    %0 = arith.muli %arg1, %c1_i32 : i32
    %1 = arith.addi %0, %arg3 : i32
    %c0_i32 = arith.constant 0 : i32
    %c0_i32_0 = arith.constant 0 : i32
    return %arg2, %arg0, %1, %c0_i32 : i32, i32, i32, i32
  }
  func.func @transform_1(%arg0: i32, %arg1: i32, %arg2: i32, %arg3: i32) -> (i32, i32, i32, i32) {
    %c1_i32 = arith.constant 1 : i32
    %0 = arith.muli %arg1, %c1_i32 : i32
    %1 = arith.addi %0, %arg3 : i32
    %c0_i32 = arith.constant 0 : i32
    %c0_i32_0 = arith.constant 0 : i32
    return %arg2, %arg0, %1, %c0_i32 : i32, i32, i32, i32
  }
  func.func @transform_2(%arg0: i32, %arg1: i32, %arg2: i32, %arg3: i32) -> (i32, i32, i32, i32) {
    %c0_i32 = arith.constant 0 : i32
    %c0_i32_0 = arith.constant 0 : i32
    %c0_i32_1 = arith.constant 0 : i32
    return %arg0, %arg1, %c0_i32, %c0_i32_0 : i32, i32, i32, i32
  }
  func.func @transform_3(%arg0: i32, %arg1: i32, %arg2: i32, %arg3: i32) -> (i32, i32, i32, i32) {
    %c0_i32 = arith.constant 0 : i32
    %c0_i32_0 = arith.constant 0 : i32
    %c0_i32_1 = arith.constant 0 : i32
    return %arg0, %arg1, %c0_i32, %c0_i32_0 : i32, i32, i32, i32
  }
}

</mosaic_0001>

<llo_original>
// kernel: tpu_custom_call.1
$region0: #{tpu_custom_call.1}
  #allocation0 [shape = 'u32[]', space=smem, size = 0x4, offset = 0x4, fixed_abs, tag = 'smem constant byte address 0x4 - core index']
  #allocation1 [shape = 'u32[144,128]{1,0:T(1,128)}', space=vmem, size = 0x12000, scoped, tag = 'internal scratch']
  #allocation2 [shape = 'f32[8,128]{1,0:T(8,128)}', space=vmem, size = 0x1000, scoped, tag = 'scratch operand']
  #allocation3 [shape = 'f32[8,128]{1,0:T(8,128)}', space=vmem, size = 0x1000, scoped, tag = 'scratch operand']
  %s0 = inlined_call_operand.hbm [shape: f32[2,4,8,128], index: 0, kind: input, shape index: {}]
  %s1 = inlined_call_operand.hbm [shape: f32[2,4,8,128], index: 1, kind: input, shape index: {}]
  %s2 = inlined_call_operand.vmem [shape: f32[4,1,1,1], index: 2, kind: output, shape index: {0}]
  %s3 = inlined_call_operand.vmem [shape: f32[4,1,1,1], index: 3, kind: output, shape index: {1}]
  %4 = xla_tuple %s2, %s3
  %s5 = sld [smem:[#allocation0]]
  $region65: #{tpu_custom_call.1} parent=0
    _
  %s7 = ssub.s32 1, %s5
  %s8 = scalar_select 0, %s7, %s5
  $region1: #{tpu_custom_call.1} parent=0
    #allocation4 [shape = 'u8[8192]{0}', space=vmem, size = 0x2000, scoped, tag = 'input window, operand 0']
    #allocation5 [shape = 's32[2]{0}', space=sflag, size = 0x8, scoped, tag = 'scoped memory for tpu_custom_call.1']
    #allocation6 [shape = 'u8[8192]{0}', space=vmem, size = 0x2000, scoped, tag = 'input window, operand 1']
    #allocation7 [shape = 's32[2]{0}', space=sflag, size = 0x8, scoped, tag = 'scoped memory for tpu_custom_call.1']
    %9 = vsyncpa [#allocation5], 0
    %s10 = scalar_lea.sflag [#allocation5], 1
    %11 = vsyncpa %s10, 0
    %12 = vsyncpa [#allocation7], 0
    %s13 = scalar_lea.sflag [#allocation7], 1
    %14 = vsyncpa %s13, 0
    loop: start=0, step=1, limit=10
    $region2: #{tpu_custom_call.1} parent=1 // loop_pre_header
      _
    $region3: #{tpu_custom_call.1} parent=1 // loop_header
      %s16 = sphi 0, %s20
      %p17 = scmp.ge.s32.totalorder %s16, 10
      %s23 = sphi 0, %s49
      %s24 = sphi 0, %s45
      %s25 = sphi 0, %s41
      %s26 = sphi 0, %s37
      %s27 = sphi 0, %s23
      %s28 = sphi 0, %s24
      %s29 = sphi 0, %s25
      %s30 = sphi 0, %s26
      %s31 = sphi 0, %s27
      %s32 = sphi 0, %s28
      %s33 = sphi 0, %s29
      %s34 = sphi 0, %s30
      %s58 = sphi 0, %s60
      %s61 = sphi 0, %s58
      %s62 = sphi 0, %s61
      %s78 = sphi 0, %s62
      %s90 = sphi 0, %s92
      %s93 = sphi 0, %s90
      %s94 = sphi 0, %s93
      %s110 = sphi 0, %s94
      %s118 = sphi 0, %s120
      %s121 = sphi 0, %s118
      %s122 = sphi 0, %s121
      %s138 = sphi 0, %s122
      %s146 = sphi 0, %s148
      %s149 = sphi 0, %s146
      %s150 = sphi 0, %s149
      %s166 = sphi 0, %s150
    $region4: #{tpu_custom_call.1} parent=1 // loop_header_branch
      %19 = sbr.rel (%p17) target = $region8
    $region5: #{tpu_custom_call.1} parent=1 // loop_body
      %s21 = ssub.s32 %s16, 1
      %s22 = ssub.s32 %s16, 2
      %s35 = sadd.s32 1, %s26
      %p36 = scmp.ge.s32.totalorder %s35, 1
      %s37 = scalar_select %p36, 0, %s35
      %s38 = sadd.s32 1, %s25
      %s39 = scalar_select %p36, %s38, %s25
      %p40 = scmp.ge.s32.totalorder %s39, 2
      %s41 = scalar_select %p40, 0, %s39
      %s42 = sadd.s32 1, %s24
      %s43 = scalar_select %p40, %s42, %s24
      %p44 = scmp.ge.s32.totalorder %s43, 1
      %s45 = scalar_select %p44, 0, %s43
      %s46 = sadd.s32 1, %s23
      %s47 = scalar_select %p44, %s46, %s23
      %p48 = scmp.ge.s32.totalorder %s47, 4
      %s49 = scalar_select %p48, 0, %s47
      %s50 = sadd.s32 %s24, %s26
      %s51 = sadd.s32 %s45, %s37
      %s52 = ssub.s32 %s25, %s41
      %s53 = ssub.s32 %s23, %s49
      %s54 = sor.u32 %s52, %s53
      %s55 = ssub.s32 %s50, %s51
      %s56 = sor.u32 %s54, %s55
      %p57 = scmp.eq.s32.totalorder %s56, 0
      %s59 = sadd.s32 %s58, 1
      %s60 = scalar_select %p57, %s58, %s59
      %p63 = pneg %p57
      %p64 = scmp.eq.s32.totalorder %s16, 7
      %p65 = por %p63, %p64
      %p66 = scmp.ne.s32.totalorder %s58, %s61
      %p67 = scmp.eq.s32.totalorder %s16, 0
      %p68 = por %p66, %p67
      %p69 = scmp.ne.s32.totalorder %s58, %s61
      %p70 = scmp.eq.s32.totalorder %s21, 7
      %p71 = por %p69, %p70
      %p72 = scmp.ne.s32.totalorder %s61, %s62
      %p73 = scmp.eq.s32.totalorder %s21, 0
      %p74 = por %p72, %p73
      %p75 = scmp.ne.s32.totalorder %s61, %s62
      %p76 = scmp.eq.s32.totalorder %s22, 7
      %p77 = por %p75, %p76
      %p79 = scmp.ne.s32.totalorder %s62, %s78
      %p80 = scmp.eq.s32.totalorder %s22, 0
      %p81 = por %p79, %p80
      %s82 = sadd.s32 %s24, %s26
      %s83 = sadd.s32 %s45, %s37
      %s84 = ssub.s32 %s25, %s41
      %s85 = ssub.s32 %s23, %s49
      %s86 = sor.u32 %s84, %s85
      %s87 = ssub.s32 %s82, %s83
      %s88 = sor.u32 %s86, %s87
      %p89 = scmp.eq.s32.totalorder %s88, 0
      %s91 = sadd.s32 %s90, 1
      %s92 = scalar_select %p89, %s90, %s91
      %p95 = pneg %p89
      %p96 = scmp.eq.s32.totalorder %s16, 7
      %p97 = por %p95, %p96
      %p98 = scmp.ne.s32.totalorder %s90, %s93
      %p99 = scmp.eq.s32.totalorder %s16, 0
      %p100 = por %p98, %p99
      %p101 = scmp.ne.s32.totalorder %s90, %s93
      %p102 = scmp.eq.s32.totalorder %s21, 7
      %p103 = por %p101, %p102
      %p104 = scmp.ne.s32.totalorder %s93, %s94
      %p105 = scmp.eq.s32.totalorder %s21, 0
      %p106 = por %p104, %p105
      %p107 = scmp.ne.s32.totalorder %s93, %s94
      %p108 = scmp.eq.s32.totalorder %s22, 7
      %p109 = por %p107, %p108
      %p111 = scmp.ne.s32.totalorder %s94, %s110
      %p112 = scmp.eq.s32.totalorder %s22, 0
      %p113 = por %p111, %p112
      %s114 = ssub.s32 %s23, %s49
      %s115 = ssub.s32 %s24, %s45
      %s116 = sor.u32 %s114, %s115
      %p117 = scmp.eq.s32.totalorder %s116, 0
      %s119 = sadd.s32 %s118, 1
      %s120 = scalar_select %p117, %s118, %s119
      %p123 = pneg %p117
      %p124 = scmp.eq.s32.totalorder %s16, 7
      %p125 = por %p123, %p124
      %p126 = scmp.ne.s32.totalorder %s118, %s121
      %p127 = scmp.eq.s32.totalorder %s16, 0
      %p128 = por %p126, %p127
      %p129 = scmp.ne.s32.totalorder %s118, %s121
      %p130 = scmp.eq.s32.totalorder %s21, 7
      %p131 = por %p129, %p130
      %p132 = scmp.ne.s32.totalorder %s121, %s122
      %p133 = scmp.eq.s32.totalorder %s21, 0
      %p134 = por %p132, %p133
      %p135 = scmp.ne.s32.totalorder %s121, %s122
      %p136 = scmp.eq.s32.totalorder %s22, 7
      %p137 = por %p135, %p136
      %p139 = scmp.ne.s32.totalorder %s122, %s138
      %p140 = scmp.eq.s32.totalorder %s22, 0
      %p141 = por %p139, %p140
      %s142 = ssub.s32 %s23, %s49
      %s143 = ssub.s32 %s24, %s45
      %s144 = sor.u32 %s142, %s143
      %p145 = scmp.eq.s32.totalorder %s144, 0
      %s147 = sadd.s32 %s146, 1
      %s148 = scalar_select %p145, %s146, %s147
      %p151 = pneg %p145
      %p152 = scmp.eq.s32.totalorder %s16, 7
      %p153 = por %p151, %p152
      %p154 = scmp.ne.s32.totalorder %s146, %s149
      %p155 = scmp.eq.s32.totalorder %s16, 0
      %p156 = por %p154, %p155
      %p157 = scmp.ne.s32.totalorder %s146, %s149
      %p158 = scmp.eq.s32.totalorder %s21, 7
      %p159 = por %p157, %p158
      %p160 = scmp.ne.s32.totalorder %s149, %s150
      %p161 = scmp.eq.s32.totalorder %s21, 0
      %p162 = por %p160, %p161
      %p163 = scmp.ne.s32.totalorder %s149, %s150
      %p164 = scmp.eq.s32.totalorder %s22, 7
      %p165 = por %p163, %p164
      %p167 = scmp.ne.s32.totalorder %s150, %s166
      %p168 = scmp.eq.s32.totalorder %s22, 0
      %p169 = por %p167, %p168
      %p170 = scmp.le.s32.totalorder 1, %s16
      %p171 = scmp.lt.s32.totalorder %s16, 9
      %p172 = pnand %p170, %p171
      %p173 = pneg %p172
      // Predicated region
      $region9: #{tpu_custom_call.1} parent=5 // pred_check
        _
      $region10: #{tpu_custom_call.1} parent=5 // pred_check_branch
        %175 = sbr.rel (%p172) target = $region12
      $region11: #{tpu_custom_call.1} parent=5 // pred_region
        %s176 = ssub.s32 %s16, 1
      $region12: #{tpu_custom_call.1} parent=5 // pred_fallthru
        _
      %p177 = scmp.lt.s32.totalorder %s16, 8
      // Predicated region
      $region13: #{tpu_custom_call.1} parent=5 // pred_check
        %p178 = pneg %p177
      $region14: #{tpu_custom_call.1} parent=5 // pred_check_branch
        %180 = sbr.rel (%p178) target = $region16
      $region15: #{tpu_custom_call.1} parent=5 // pred_region
        // Predicated region
        $region17: #{tpu_custom_call.1} parent=15 // pred_check
          %p181 = pneg %p68
        $region18: #{tpu_custom_call.1} parent=15 // pred_check_branch
          %183 = sbr.rel (%p181) target = $region20
        $region19: #{tpu_custom_call.1} parent=15 // pred_region
          %s184 = sand.u32 %s58, 1
          %s185 = scalar_lea.sflag [#allocation5], %s184
          %s186 = sand.u32 %s58, 1
          %s187 = smul.addr %s186, 8
          %s188 = scalar_lea.vmem [#allocation4], %s187
          %s189 = sadd.s32 %s24, %s26
          %s191 = ssub.s32 128, 128
          %192 = vsyncadd %s185, %s191
          %s193 = sadd.s32 %s189, %s23
          %s194 = smul.addr %s25, 4
          %s195 = sadd.s32 %s193, %s194
          %s196 = smul.addr %s195, 128
          %s197 = scalar_lea.hbm %s0, %s196
          %s199 = sshll.u32 %s188, 4
          %s200 = int_to_ptr.vmem [resolvable:$true] %s199
          %202 = dma.hbm_to_vmem [thread:$0]  %s197, 128, %s200, %s185
        $region20: #{tpu_custom_call.1} parent=15 // pred_fallthru
          _
        // Predicated region
        $region21: #{tpu_custom_call.1} parent=15 // pred_check
          %p203 = pneg %p100
        $region22: #{tpu_custom_call.1} parent=15 // pred_check_branch
          %205 = sbr.rel (%p203) target = $region24
        $region23: #{tpu_custom_call.1} parent=15 // pred_region
          %s206 = sand.u32 %s90, 1
          %s207 = scalar_lea.sflag [#allocation7], %s206
          %s208 = sand.u32 %s90, 1
          %s209 = smul.addr %s208, 8
          %s210 = scalar_lea.vmem [#allocation6], %s209
          %s211 = sadd.s32 %s24, %s26
          %s213 = ssub.s32 128, 128
          %214 = vsyncadd %s207, %s213
          %s215 = sadd.s32 %s211, %s23
          %s216 = smul.addr %s25, 4
          %s217 = sadd.s32 %s215, %s216
          %s218 = smul.addr %s217, 128
          %s219 = scalar_lea.hbm %s1, %s218
          %s221 = sshll.u32 %s210, 4
          %s222 = int_to_ptr.vmem [resolvable:$true] %s221
          %224 = dma.hbm_to_vmem [thread:$0]  %s219, 128, %s222, %s207
        $region24: #{tpu_custom_call.1} parent=15 // pred_fallthru
          _
      $region16: #{tpu_custom_call.1} parent=5 // pred_fallthru
        _
      %p225 = scmp.le.s32.totalorder 1, %s16
      %p226 = scmp.lt.s32.totalorder %s16, 9
      %p227 = pnand %p225, %p226
      %p228 = pneg %p227
      // Predicated region
      $region25: #{tpu_custom_call.1} parent=5 // pred_check
        _
      $region26: #{tpu_custom_call.1} parent=5 // pred_check_branch
        %230 = sbr.rel (%p227) target = $region28
      $region27: #{tpu_custom_call.1} parent=5 // pred_region
        %s231 = ssub.s32 %s16, 1
        %s232 = sand.u32 %s61, 1
        %s233 = scalar_lea.sflag [#allocation5], %s232
        %s234 = sand.u32 %s61, 1
        %s235 = smul.addr %s234, 8
        %s236 = scalar_lea.vmem [#allocation4], %s235
        // Predicated region
        $region29: #{tpu_custom_call.1} parent=27 // pred_check
          %p237 = pneg %p74
        $region30: #{tpu_custom_call.1} parent=27 // pred_check_branch
          %239 = sbr.rel (%p237) target = $region32
        $region31: #{tpu_custom_call.1} parent=27 // pred_region
          %240 = dma.done %s233, 128
        $region32: #{tpu_custom_call.1} parent=27 // pred_fallthru
          _
        %s241 = sand.u32 %s93, 1
        %s242 = scalar_lea.sflag [#allocation7], %s241
        %s243 = sand.u32 %s93, 1
        %s244 = smul.addr %s243, 8
        %s245 = scalar_lea.vmem [#allocation6], %s244
        // Predicated region
        $region33: #{tpu_custom_call.1} parent=27 // pred_check
          %p246 = pneg %p106
        $region34: #{tpu_custom_call.1} parent=27 // pred_check_branch
          %248 = sbr.rel (%p246) target = $region36
        $region35: #{tpu_custom_call.1} parent=27 // pred_region
          %249 = dma.done %s242, 128
        $region36: #{tpu_custom_call.1} parent=27 // pred_fallthru
          _
        %s250 = sand.u32 %s61, 1
        %s251 = scalar_lea.sflag [#allocation5], %s250
        %s252 = sand.u32 %s61, 1
        %s253 = smul.addr %s252, 8
        %s254 = scalar_lea.vmem [#allocation4], %s253
        %p255 = pneg %p74
        %p256 = pneg %p71
        %s257 = sand.u32 %s93, 1
        %s258 = scalar_lea.sflag [#allocation7], %s257
        %s259 = sand.u32 %s93, 1
        %s260 = smul.addr %s259, 8
        %s261 = scalar_lea.vmem [#allocation6], %s260
        %p262 = pneg %p106
        %p263 = pneg %p103
        %p264 = pneg %p134
        %p265 = pneg %p131
        %p266 = scmp.lt.s32.totalorder %s27, 3
        %s267 = scalar_select %p266, %s27, 3
        %p268 = scmp.lt.s32.totalorder %s28, 0
        %s269 = scalar_select %p268, %s28, 0
        %s270 = sadd.s32 %s269, %s267
        %s271 = scalar_lea.vmem %s2, %s270
        %p272 = pneg %p162
        %p273 = pneg %p159
        %p274 = scmp.lt.s32.totalorder %s27, 3
        %s275 = scalar_select %p274, %s27, 3
        %p276 = scmp.lt.s32.totalorder %s28, 0
        %s277 = scalar_select %p276, %s28, 0
        %s278 = sadd.s32 %s277, %s275
        %s279 = scalar_lea.vmem %s3, %s278
        %s280 = sadd.s32 %s28, %s30
        %s281 = sadd.s32 %s28, %s30
        %p282 = scmp.lt.s32.totalorder %s27, 3
        %s283 = scalar_select %p282, %s27, 3
        %p284 = scmp.lt.s32.totalorder %s28, 0
        %s285 = scalar_select %p284, %s28, 0
        %s286 = sadd.s32 %s285, %s283
        %s287 = scalar_lea.vmem %s2, %s286
        %p288 = scmp.lt.s32.totalorder %s27, 3
        %s289 = scalar_select %p288, %s27, 3
        %p290 = scmp.lt.s32.totalorder %s28, 0
        %s291 = scalar_select %p290, %s28, 0
        %s292 = sadd.s32 %s291, %s289
        %s293 = scalar_lea.vmem %s3, %s292
        %p294 = scmp.eq.s32.totalorder %s29, 0
        %p295 = scmp.eq.s32.totalorder %s30, 0
        %p296 = pnand %p294, %p295
        %p297 = pneg %p296
        // Predicated region
        $region37: #{tpu_custom_call.1} parent=27 // pred_check
          _
        $region38: #{tpu_custom_call.1} parent=27 // pred_check_branch
          %299 = sbr.rel (%p296) target = $region40
        $region39: #{tpu_custom_call.1} parent=27 // pred_region
          %300 = vst [vmem:[#allocation2] sm:$0xff] 0.0
          %301 = vst [vmem:[#allocation3] sm:$0xff] 0.0
        $region40: #{tpu_custom_call.1} parent=27 // pred_fallthru
          _
        %v302 = vld [vmem:[#allocation2] sm:$0xff]
        %v303 = vld [vmem:[#allocation3] sm:$0xff]
        %v304 = vld [vmem:[%s236] sm:$0xff]
        %v305 = vld [vmem:[%s245] sm:$0xff]
        %v306 = vmul.f32 %v304, %v305
        %v307 = vadd.f32 %v306, 0.0
        %v308 = vadd.f32 %v302, %v307
        %v309 = vmul.f32 %v304, %v304
        %v310 = vmul.f32 %v305, %v305
        %v311 = vadd.f32 %v309, %v310
        %v312 = vadd.f32 %v311, 0.0
        %v313 = vadd.f32 %v303, %v312
        %314 = vst [vmem:[#allocation2] sm:$0xff] %v308
        %315 = vst [vmem:[#allocation3] sm:$0xff] %v313
        %p316 = scmp.eq.s32.totalorder %s29, 1
        %p317 = pnand %p316, %p295
        %p318 = pneg %p317
        // Predicated region
        $region41: #{tpu_custom_call.1} parent=27 // pred_check
          _
        $region42: #{tpu_custom_call.1} parent=27 // pred_check_branch
          %320 = sbr.rel (%p317) target = $region44
        $region43: #{tpu_custom_call.1} parent=27 // pred_region
          %v321 = vld [vmem:[#allocation2] sm:$0xff]
          %322 = vadd.xlane.f32.xlu0 %v321
          %v323 = vpop.xlane.xlu0 %322
          %v324 = vrot.slane %v323, 4
          %v325 = vadd.f32 %v323, %v324
          %v326 = vrot.slane %v325, 2
          %v327 = vadd.f32 %v325, %v326
          %v328 = vrot.slane %v327, 1
          %v329 = vadd.f32 %v327, %v328
          %s330 = vtos %v329
          %v331 = vstv %s330
          %vm332 = vcmask 0
          %333 = vst.msk [vmem:[%s287] sm:$0x1] %vm332, %v331
          %v334 = vld [vmem:[#allocation3] sm:$0xff]
          %335 = vadd.xlane.f32.xlu0 %v334
          %v336 = vpop.xlane.xlu0 %335
          %v337 = vrot.slane %v336, 4
          %v338 = vadd.f32 %v336, %v337
          %v339 = vrot.slane %v338, 2
          %v340 = vadd.f32 %v338, %v339
          %v341 = vrot.slane %v340, 1
          %v342 = vadd.f32 %v340, %v341
          %s343 = vtos %v342
          %v344 = vstv %s343
          %345 = vst.msk [vmem:[%s293] sm:$0x1] %vm332, %v344
        $region44: #{tpu_custom_call.1} parent=27 // pred_fallthru
          _
        %p346 = scmp.lt.s32.totalorder %s27, 3
        %s347 = scalar_select %p346, %s27, 3
        %p348 = scmp.lt.s32.totalorder %s28, 0
        %s349 = scalar_select %p348, %s28, 0
        %s350 = sadd.s32 %s349, %s347
        %s351 = scalar_lea.vmem %s2, %s350
        %p352 = scmp.lt.s32.totalorder %s27, 3
        %s353 = scalar_select %p352, %s27, 3
        %p354 = scmp.lt.s32.totalorder %s28, 0
        %s355 = scalar_select %p354, %s28, 0
        %s356 = sadd.s32 %s355, %s353
        %s357 = scalar_lea.vmem %s3, %s356
        // Predicated region
        $region45: #{tpu_custom_call.1} parent=27 // pred_check
          %p358 = pneg %p131
        $region46: #{tpu_custom_call.1} parent=27 // pred_check_branch
          %360 = sbr.rel (%p358) target = $region48
        $region47: #{tpu_custom_call.1} parent=27 // pred_region
          _
        $region48: #{tpu_custom_call.1} parent=27 // pred_fallthru
          _
        // Predicated region
        $region49: #{tpu_custom_call.1} parent=27 // pred_check
          %p361 = pneg %p159
        $region50: #{tpu_custom_call.1} parent=27 // pred_check_branch
          %363 = sbr.rel (%p361) target = $region52
        $region51: #{tpu_custom_call.1} parent=27 // pred_region
          _
        $region52: #{tpu_custom_call.1} parent=27 // pred_fallthru
          _
      $region28: #{tpu_custom_call.1} parent=5 // pred_fallthru
        _
      %p364 = scmp.le.s32.totalorder 2, %s16
      // Predicated region
      $region53: #{tpu_custom_call.1} parent=5 // pred_check
        %p365 = pneg %p364
      $region54: #{tpu_custom_call.1} parent=5 // pred_check_branch
        %367 = sbr.rel (%p365) target = $region56
      $region55: #{tpu_custom_call.1} parent=5 // pred_region
        %s368 = ssub.s32 %s16, 2
        // Predicated region
        $region57: #{tpu_custom_call.1} parent=55 // pred_check
          %p369 = pneg %p137
        $region58: #{tpu_custom_call.1} parent=55 // pred_check_branch
          %371 = sbr.rel (%p369) target = $region60
        $region59: #{tpu_custom_call.1} parent=55 // pred_region
          %p372 = scmp.lt.s32.totalorder %s31, 3
          %s373 = scalar_select %p372, %s31, 3
          %p374 = scmp.lt.s32.totalorder %s32, 0
          %s375 = scalar_select %p374, %s32, 0
          %s376 = sadd.s32 %s375, %s373
          %s377 = scalar_lea.vmem %s2, %s376
        $region60: #{tpu_custom_call.1} parent=55 // pred_fallthru
          _
        // Predicated region
        $region61: #{tpu_custom_call.1} parent=55 // pred_check
          %p378 = pneg %p165
        $region62: #{tpu_custom_call.1} parent=55 // pred_check_branch
          %380 = sbr.rel (%p378) target = $region64
        $region63: #{tpu_custom_call.1} parent=55 // pred_region
          %p381 = scmp.lt.s32.totalorder %s31, 3
          %s382 = scalar_select %p381, %s31, 3
          %p383 = scmp.lt.s32.totalorder %s32, 0
          %s384 = scalar_select %p383, %s32, 0
          %s385 = sadd.s32 %s384, %s382
          %s386 = scalar_lea.vmem %s3, %s385
        $region64: #{tpu_custom_call.1} parent=55 // pred_fallthru
          _
      $region56: #{tpu_custom_call.1} parent=5 // pred_fallthru
        _
    $region6: #{tpu_custom_call.1} parent=1 // loop_footer
      %s20 = sadd.s32 1, %s16
    $region7: #{tpu_custom_call.1} parent=1 // loop_footer_branch
      %15 = sbr.rel target = $region3
    $region8: #{tpu_custom_call.1} parent=1 // loop_exit
      _
    %387 = vsyncpa [#allocation5], 1
    %s388 = scalar_lea.sflag [#allocation5], 1
    %389 = vsyncpa %s388, 1
    %390 = vsyncpa [#allocation7], 1
    %s391 = scalar_lea.sflag [#allocation7], 1
    %392 = vsyncpa %s391, 1

</llo_original>
